<compile_context>
chip_gen: v6e
topology: v6e:2x2x1
jax: 0.10.0
libtpu: 0.0.40
codegen_flags: <defaults>
</compile_context>

<pallas_src>
import jax
import jax.numpy as jnp
from jax.experimental import pallas as pl
from jax.experimental.pallas import tpu as pltpu


# Single-block budget: input + output tiles (double-buffered by the runtime)
# stay far below the smallest default scoped VMEM limit across v5e/v6e/v7x.
_SINGLE_BLOCK_BYTES = 8 * 1024 * 1024


def _identity_kernel(x_ref, o_ref):
    # Pure pass-through: the reference module performs no computation.
    o_ref[...] = x_ref[...]


def _lane_dense_shape(total: int, max_lanes: int = 4096) -> tuple[int, int]:
    """Pick (rows, lanes): lanes a wide multiple of 128, rows % 8 == 0 kept."""
    assert total % 128 == 0, "demo layout expects total elements % 128 == 0"
    lanes = 128
    while (
        lanes * 2 <= max_lanes
        and total % (lanes * 2) == 0
        and (total // (lanes * 2)) % 8 == 0
    ):
        lanes *= 2
    return total // lanes, lanes


def _identity_pallas(x: jax.Array) -> jax.Array:
    """Identity copy through a single full-array, lane-dense Pallas block."""
    rows, lanes = _lane_dense_shape(x.size)
    x2 = x.reshape(rows, lanes)

    nbytes = x2.size * x2.dtype.itemsize
    # TODO(synk): if inputs ever exceed the single-block VMEM budget, switch to
    # a row-tiled grid (tile_r ≈ 512, largest divisor of rows) instead.
    assert nbytes <= _SINGLE_BLOCK_BYTES, "demo path expects a VMEM-sized input"

    y2 = pl.pallas_call(
        _identity_kernel,
        out_shape=jax.ShapeDtypeStruct((rows, lanes), x2.dtype),
        grid=(1,),
        in_specs=[pl.BlockSpec((rows, lanes), lambda i: (0, 0))],
        out_specs=pl.BlockSpec((rows, lanes), lambda i: (0, 0)),
        compiler_params=pltpu.CompilerParams(
            dimension_semantics=("arbitrary",),
        ),
    )(x2)
    return y2.reshape(x.shape)


class TrpAttention:
    """JAX/Pallas port of the (empty) PyTorch TrpAttention module."""

    def __init__(self):
        # Reference __init__ is `pass`: no parameters to initialize.
        pass

    def forward(self):
        # Reference forward is `pass`: takes no inputs, returns None.
        return None

    __call__ = forward


if __name__ == "__main__":
    # Exercise the empty-module semantics.
    mod = TrpAttention()
    assert mod.forward() is None  # matches PyTorch: forward() returns None
    assert mod() is None

    # Exercise the placeholder Pallas identity kernel once on a small
    # deterministic NCHW input (batch=2, channels=4, spatial=16x16).
    key = jax.random.PRNGKey(0)
    x = jax.random.normal(key, (2, 4, 16, 16), dtype=jnp.float32)

    y = _identity_pallas(x)
    jax.block_until_ready(y)

    assert y.shape == x.shape and y.dtype == x.dtype
    assert bool(jnp.allclose(y, x))

    print("KERNEL_OK")
</pallas_src>

<mosaic_0001>
module attributes {stable_mosaic.version = 11 : i64} {
  func.func @_identity_kernel(%arg0: i32, %arg1: memref<8x256xf32, #tpu.memory_space<vmem>>, %arg2: memref<8x256xf32, #tpu.memory_space<vmem>>) attributes {dimension_semantics = [#tpu.dimension_semantics<arbitrary>], iteration_bounds = array<i64: 1>, scalar_prefetch = 0 : i64, scratch_operands = 0 : i64, tpu.core_type = #tpu.core_type<tc>, window_params = [{pipeline_mode = #tpu.pipeline_mode<synchronous>, transform_indices = @transform_0, window_bounds = array<i64: 8, 256>}, {pipeline_mode = #tpu.pipeline_mode<synchronous>, transform_indices = @transform_1, window_bounds = array<i64: 8, 256>}]} {
    %c0 = arith.constant 0 : index
    %c0_0 = arith.constant 0 : index
    %0 = vector.load %arg1[%c0, %c0_0] : memref<8x256xf32, #tpu.memory_space<vmem>>, vector<8x256xf32>
    %c0_1 = arith.constant 0 : index
    %c0_2 = arith.constant 0 : index
    %1 = vector.load %arg2[%c0_1, %c0_2] : memref<8x256xf32, #tpu.memory_space<vmem>>, vector<8x256xf32>
    tpu.vector_store %arg2[%c0_1, %c0_2], %0 {strides = array<i32>} : memref<8x256xf32, #tpu.memory_space<vmem>>, vector<8x256xf32>,
    return
  }
  func.func @transform_0(%arg0: i32) -> (i32, i32) {
    %c0_i32 = arith.constant 0 : i32
    %c0_i32_0 = arith.constant 0 : i32
    %c0_i32_1 = arith.constant 0 : i32
    return %c0_i32, %c0_i32_0 : i32, i32
  }
  func.func @transform_1(%arg0: i32) -> (i32, i32) {
    %c0_i32 = arith.constant 0 : i32
    %c0_i32_0 = arith.constant 0 : i32
    %c0_i32_1 = arith.constant 0 : i32
    return %c0_i32, %c0_i32_0 : i32, i32
  }
}

</mosaic_0001>

<llo_original>
// kernel: tpu_custom_call.1
$region0: #{tpu_custom_call.1}
  #allocation0 [shape = 'u32[]', space=smem, size = 0x4, offset = 0x4, fixed_abs, tag = 'smem constant byte address 0x4 - core index']
  #allocation1 [shape = 'u32[144,128]{1,0:T(1,128)}', space=vmem, size = 0x12000, scoped, tag = 'internal scratch']
  %s0 = inlined_call_operand.hbm [shape: f32[8,256], index: 0, kind: input, shape index: {}]
  %s1 = inlined_call_operand.hbm [shape: f32[8,256], index: 1, kind: output, shape index: {}]
  %s2 = sld [smem:[#allocation0]]
  $region18: #{tpu_custom_call.1} parent=0
    _
  %s4 = ssub.s32 1, %s2
  %s5 = scalar_select 0, %s4, %s2
  $region1: #{tpu_custom_call.1} parent=0
    #allocation2 [shape = 'u8[8192]{0}', space=vmem, size = 0x2000, scoped, tag = 'input window, operand 0, single buffered']
    #allocation3 [shape = 's32[1]{0}', space=sflag, size = 0x4, scoped, tag = 'scoped memory for tpu_custom_call.1']
    #allocation4 [shape = 's32[1]{0}', space=sflag, size = 0x4, scoped, tag = 'scoped memory for tpu_custom_call.1']
    #allocation5 [shape = 'u8[8192]{0}', space=vmem, size = 0x2000, scoped, tag = 'output window, operand 0, single buffered']
    %6 = vsyncpa [#allocation3], 0
    %7 = vsyncpa [#allocation4], 0
    // Predicated region
    $region2: #{tpu_custom_call.1} parent=1 // pred_check
      _
    $region3: #{tpu_custom_call.1} parent=1 // pred_check_branch
      %9 = sbr.rel (0) target = $region5
    $region4: #{tpu_custom_call.1} parent=1 // pred_region
      %s11 = ssub.s32 256, 256
      %12 = vsyncadd [#allocation3], %s11
      %s14 = sshll.u32 [#allocation2], 4
      %s15 = int_to_ptr.vmem [resolvable:$true] %s14
      %17 = dma.hbm_to_vmem [thread:$0]  %s0, 256, %s15, [#allocation3]
    $region5: #{tpu_custom_call.1} parent=1 // pred_fallthru
      _
    // Predicated region
    $region6: #{tpu_custom_call.1} parent=1 // pred_check
      _
    $region7: #{tpu_custom_call.1} parent=1 // pred_check_branch
      %19 = sbr.rel (0) target = $region9
    $region8: #{tpu_custom_call.1} parent=1 // pred_region
      %20 = dma.done [#allocation3], 256
    $region9: #{tpu_custom_call.1} parent=1 // pred_fallthru
      _
    %v21 = vld [vmem:[#allocation2] sm:$0xff]
    %v22 = vld [vmem:[#allocation2 + $0x8] sm:$0xff]
    %23 = vst [vmem:[#allocation5] sm:$0xff] %v21
    %24 = vst [vmem:[#allocation5 + $0x8] sm:$0xff] %v22
    // Predicated region
    $region10: #{tpu_custom_call.1} parent=1 // pred_check
      _
    $region11: #{tpu_custom_call.1} parent=1 // pred_check_branch
      %26 = sbr.rel (0) target = $region13
    $region12: #{tpu_custom_call.1} parent=1 // pred_region
      %s28 = ssub.s32 256, 256
      %29 = vsyncadd [#allocation4], %s28
      %s31 = sshll.u32 [#allocation5], 4
      %s32 = int_to_ptr.vmem [resolvable:$true] %s31
      %34 = dma.vmem_to_hbm [thread:$0]  %s32, 256, %s1, [#allocation4]
    $region13: #{tpu_custom_call.1} parent=1 // pred_fallthru
      _
    // Predicated region
    $region14: #{tpu_custom_call.1} parent=1 // pred_check
      _
    $region15: #{tpu_custom_call.1} parent=1 // pred_check_branch
      %36 = sbr.rel (0) target = $region17
    $region16: #{tpu_custom_call.1} parent=1 // pred_region
      %37 = dma.done [#allocation4], 256
    $region17: #{tpu_custom_call.1} parent=1 // pred_fallthru
      _
    %38 = vsyncpa [#allocation3], 1
    %39 = vsyncpa [#allocation4], 1

</llo_original>
